<compile_context>
chip_gen: v5e
topology: v5e:2x2
jax: 0.10.0
libtpu: 0.0.40
codegen_flags: <defaults>
</compile_context>

<pallas_src>
import jax
import jax.numpy as jnp
from jax.experimental import pallas as pl
from jax.experimental.pallas import tpu as pltpu


def _gaussian_mf_kernel(params_ref, x_ref, o_ref):
    # params_ref is an SMEM f32[2] scalar-prefetch ref: [mu, -1/(2*std^2)]
    mu = params_ref[0]
    scale = params_ref[1]
    d = x_ref[...] - mu
    o_ref[...] = jnp.exp((d * d) * scale).astype(o_ref.dtype)


def gaussian_membership_function(x, mu, std, *, target_block_bytes=4 << 20):
    """exp(-(x - mu)^2 / (2 * std^2)) for arbitrary-shaped x via a Pallas TPU
    streaming kernel.  mu/std may be Python floats or traced scalars
    (they are nn.Parameters in the reference module)."""
    orig_shape = x.shape
    dtype = x.dtype
    itemsize = jnp.dtype(dtype).itemsize

    flat = x.reshape(-1)
    n = flat.shape[0]

    # Hoisted scalar parameters (f32 scalars -> SMEM via scalar prefetch).
    mu_f = jnp.asarray(mu, dtype=jnp.float32)
    std_f = jnp.asarray(std, dtype=jnp.float32)
    scale_f = -1.0 / (2.0 * std_f * std_f)
    params = jnp.stack([mu_f, scale_f])  # shape (2,), float32

    # --- Choose a lane-dense 2-D layout and a big block -----------------
    # Wide last dim (multiple of 128) -> unmasked full-width vector stores.
    cols = 512 if n >= 8 * 512 else 128
    rows = -(-n // cols)                                   # ceil-div
    # Largest sublane-aligned row count whose block fits the byte target.
    max_rows_per_block = max(8, (target_block_bytes // (cols * itemsize)) // 8 * 8)
    row_tile = min(max_rows_per_block, ((rows + 7) // 8) * 8)
    rows_padded = ((rows + row_tile - 1) // row_tile) * row_tile
    n_padded = rows_padded * cols

    if n_padded != n:
        flat = jnp.pad(flat, (0, n_padded - n))            # pad -> compute -> slice
    x2d = flat.reshape(rows_padded, cols)

    grid = (rows_padded // row_tile,)

    cost = pl.CostEstimate(
        flops=3 * n_padded,              # sub, mul, mul
        transcendentals=n_padded,        # exp
        bytes_accessed=2 * n_padded * itemsize,
    )

    y2d = pl.pallas_call(
        _gaussian_mf_kernel,
        out_shape=jax.ShapeDtypeStruct((rows_padded, cols), dtype),
        grid_spec=pltpu.PrefetchScalarGridSpec(
            num_scalar_prefetch=1,       # params -> SMEM, first kernel arg
            grid=grid,
            in_specs=[
                pl.BlockSpec((row_tile, cols), lambda i, params: (i, 0)),
            ],
            out_specs=pl.BlockSpec((row_tile, cols), lambda i, params: (i, 0)),
        ),
        compiler_params=pltpu.CompilerParams(
            dimension_semantics=("parallel",),   # shards rows across TCs on v7x
            vmem_limit_bytes=32 << 20,           # 4 MiB blocks x ~4 buffers << 32 MiB
        ),
        cost_estimate=cost,
    )(params, x2d)

    return y2d.reshape(-1)[:n].reshape(orig_shape)


def _reference(x, mu, std):
    return jnp.exp(-jnp.power(x - mu, 2) / (2.0 * std ** 2))


if __name__ == "__main__":
    # Deterministic "parameters" (module __init__ takes scalar mu, std).
    mu = 0.5
    std = 1.25

    key = jax.random.PRNGKey(0)
    k1, k2 = jax.random.split(key)

    # Small NCHW-style input consistent with the module's elementwise forward.
    x = jax.random.normal(k1, (2, 4, 16, 16), dtype=jnp.float32)
    y = jax.block_until_ready(gaussian_membership_function(x, mu, std))
    assert y.shape == x.shape and y.dtype == x.dtype
    assert jnp.allclose(y, _reference(x, mu, std), atol=1e-6, rtol=1e-6)

    # Odd, non-tile-divisible shape to exercise the pad/slice path.
    x_odd = jax.random.normal(k2, (3, 5, 7), dtype=jnp.float32)
    y_odd = jax.block_until_ready(gaussian_membership_function(x_odd, mu, std))
    assert y_odd.shape == x_odd.shape
    assert jnp.allclose(y_odd, _reference(x_odd, mu, std), atol=1e-6, rtol=1e-6)

    print("KERNEL_OK")
</pallas_src>

<mosaic_0001>
module attributes {stable_mosaic.version = 11 : i64} {
  func.func @_gaussian_mf_kernel(%arg0: i32, %arg1: memref<2xf32, #tpu.memory_space<smem>>, %arg2: memref<16x128xf32, #tpu.memory_space<vmem>>, %arg3: memref<16x128xf32, #tpu.memory_space<vmem>>) attributes {dimension_semantics = [#tpu.dimension_semantics<parallel>], iteration_bounds = array<i64: 1>, scalar_prefetch = 1 : i64, scratch_operands = 0 : i64, tpu.core_type = #tpu.core_type<tc>, window_params = [{transform_indices = @transform_0, window_bounds = array<i64: 16, 128>}, {transform_indices = @transform_1, window_bounds = array<i64: 16, 128>}]} {
    %c0 = arith.constant 0 : index
    %0 = memref.load %arg1[%c0] : memref<2xf32, #tpu.memory_space<smem>>
    %c1 = arith.constant 1 : index
    %1 = memref.load %arg1[%c1] : memref<2xf32, #tpu.memory_space<smem>>
    %c0_0 = arith.constant 0 : index
    %c0_1 = arith.constant 0 : index
    %2 = vector.load %arg2[%c0_0, %c0_1] : memref<16x128xf32, #tpu.memory_space<vmem>>, vector<16x128xf32>
    %3 = vector.broadcast %0 : f32 to vector<16x128xf32>
    %4 = arith.subf %2, %3 : vector<16x128xf32>
    %5 = arith.mulf %4, %4 : vector<16x128xf32>
    %6 = vector.broadcast %1 : f32 to vector<16x128xf32>
    %7 = arith.mulf %5, %6 : vector<16x128xf32>
    %8 = math.exp %7 : vector<16x128xf32>
    %c0_2 = arith.constant 0 : index
    %c0_3 = arith.constant 0 : index
    %9 = vector.load %arg3[%c0_2, %c0_3] : memref<16x128xf32, #tpu.memory_space<vmem>>, vector<16x128xf32>
    tpu.vector_store %arg3[%c0_2, %c0_3], %8 {strides = array<i32>} : memref<16x128xf32, #tpu.memory_space<vmem>>, vector<16x128xf32>,
    return
  }
  func.func @transform_0(%arg0: i32, %arg1: memref<2xf32, #tpu.memory_space<smem>>) -> (i32, i32) {
    %c0_i32 = arith.constant 0 : i32
    %c0_i32_0 = arith.constant 0 : i32
    return %arg0, %c0_i32 : i32, i32
  }
  func.func @transform_1(%arg0: i32, %arg1: memref<2xf32, #tpu.memory_space<smem>>) -> (i32, i32) {
    %c0_i32 = arith.constant 0 : i32
    %c0_i32_0 = arith.constant 0 : i32
    return %arg0, %c0_i32 : i32, i32
  }
}

</mosaic_0001>

<llo_original>
// kernel: tpu_custom_call.1
$region0: #{tpu_custom_call.1}
  #allocation0 [shape = 'u32[]', space=smem, size = 0x4, offset = 0x4, fixed_abs, tag = 'smem constant byte address 0x4 - core index']
  #allocation1 [shape = 'u32[72,128]{1,0:T(1,128)}', space=vmem, size = 0x9000, scoped, tag = 'internal scratch']
  #allocation2 [shape = 's32[1]{0}', space=sflag, size = 0x4, scoped, tag = 'scoped memory for tpu_custom_call.1']
  #allocation3 [shape = 'u8[512]{0}', space=smem, size = 0x200, scoped, tag = 'prefetched SMEM operand 0']
  %s0 = inlined_call_operand.hbm [shape: f32[2], index: 0, kind: input, shape index: {}]
  %s1 = inlined_call_operand.hbm [shape: f32[16,128], index: 1, kind: input, shape index: {}]
  %s2 = inlined_call_operand.hbm [shape: f32[16,128], index: 2, kind: output, shape index: {}]
  %s3 = sld [smem:[#allocation0]]
  $region18: #{tpu_custom_call.1} parent=0
    _
  %s5 = ssub.s32 1, %s3
  %s6 = scalar_select 0, %s5, %s3
  %s8 = sshll.u32 %s0, 4
  %s9 = int_to_ptr.hbm [resolvable:$true] %s8
  %11 = dma.hbm_to_smem %s9, 16, [#allocation3], [#allocation2]
  %13 = dma.done [#allocation2], 16
  %14 = sfence
  $region1: #{tpu_custom_call.1} parent=0
    #allocation4 [shape = 'u8[8192]{0}', space=vmem, size = 0x2000, scoped, tag = 'input window, operand 1, single buffered']
    #allocation5 [shape = 's32[1]{0}', space=sflag, size = 0x4, scoped, tag = 'scoped memory for tpu_custom_call.1']
    #allocation6 [shape = 's32[1]{0}', space=sflag, size = 0x4, scoped, tag = 'scoped memory for tpu_custom_call.1']
    #allocation7 [shape = 'u8[8192]{0}', space=vmem, size = 0x2000, scoped, tag = 'output window, operand 0, single buffered']
    %15 = vsyncpa [#allocation5], 0
    %16 = vsyncpa [#allocation6], 0
    // Predicated region
    $region2: #{tpu_custom_call.1} parent=1 // pred_check
      _
    $region3: #{tpu_custom_call.1} parent=1 // pred_check_branch
      %18 = sbr.rel (0) target = $region5
    $region4: #{tpu_custom_call.1} parent=1 // pred_region
      %20 = vsyncadd [#allocation5], 0
      %s21 = sshll.u32 %s1, 4
      %s22 = int_to_ptr.hbm [resolvable:$true] %s21
      %s23 = sshll.u32 [#allocation4], 4
      %s24 = int_to_ptr.vmem [resolvable:$true] %s23
      %29 = dma.hbm_to_vmem [thread:$0]  %s22, 256, %s24, [#allocation5], 128, 128, 8
    $region5: #{tpu_custom_call.1} parent=1 // pred_fallthru
      _
    // Predicated region
    $region6: #{tpu_custom_call.1} parent=1 // pred_check
      _
    $region7: #{tpu_custom_call.1} parent=1 // pred_check_branch
      %31 = sbr.rel (0) target = $region9
    $region8: #{tpu_custom_call.1} parent=1 // pred_region
      %33 = dma.done [#allocation5], 256
    $region9: #{tpu_custom_call.1} parent=1 // pred_fallthru
      _
    %s34 = sld [smem:[#allocation3]]
    %s35 = sld [smem:[#allocation3 + $0x1]]
    %v36 = vld [vmem:[#allocation4] sm:$0xff]
    %v37 = vld [vmem:[#allocation4 + $0x8] sm:$0xff]
    %v38 = vstv %s34
    %v39 = vsub.f32 %v36, %v38
    %v40 = vsub.f32 %v37, %v38
    %v41 = vmul.f32 %v39, %v39
    %v42 = vmul.f32 %v40, %v40
    %v43 = vstv %s35
    %v44 = vmul.f32 %v41, %v43
    %v45 = vmul.f32 %v42, %v43
    %v46 = vmul.f32 %v44, 1.442695
    %v47 = vpow.pop %v46
    %v48 = vmul.f32 %v45, 1.442695
    %v49 = vpow.pop %v48
    %50 = vst [vmem:[#allocation7] sm:$0xff] %v47
    %51 = vst [vmem:[#allocation7 + $0x8] sm:$0xff] %v49
    // Predicated region
    $region10: #{tpu_custom_call.1} parent=1 // pred_check
      _
    $region11: #{tpu_custom_call.1} parent=1 // pred_check_branch
      %53 = sbr.rel (0) target = $region13
    $region12: #{tpu_custom_call.1} parent=1 // pred_region
      %55 = vsyncadd [#allocation6], 0
      %s56 = sshll.u32 [#allocation7], 4
      %s57 = int_to_ptr.vmem [resolvable:$true] %s56
      %s58 = sshll.u32 %s2, 4
      %s59 = int_to_ptr.hbm [resolvable:$true] %s58
      %64 = dma.vmem_to_hbm [thread:$0]  %s57, 256, %s59, [#allocation6], 128, 128, 8
    $region13: #{tpu_custom_call.1} parent=1 // pred_fallthru
      _
    // Predicated region
    $region14: #{tpu_custom_call.1} parent=1 // pred_check
      _
    $region15: #{tpu_custom_call.1} parent=1 // pred_check_branch
      %66 = sbr.rel (0) target = $region17
    $region16: #{tpu_custom_call.1} parent=1 // pred_region
      %68 = dma.done [#allocation6], 256
    $region17: #{tpu_custom_call.1} parent=1 // pred_fallthru
      _
    %69 = vsyncpa [#allocation5], 1
    %70 = vsyncpa [#allocation6], 1

</llo_original>
